<compile_context>
chip_gen: v5e
topology: v5e:2x2
jax: 0.10.0
libtpu: 0.0.40
codegen_flags: <defaults>
</compile_context>

<pallas_src>
import functools
import math

import jax
import jax.numpy as jnp
from jax import lax
from jax.experimental import pallas as pl
from jax.experimental.pallas import tpu as pltpu


def _round_up(x, m):
    return ((x + m - 1) // m) * m


def _vmem_budget_bytes():
    """Scoped-VMEM budget: ~3/4 of physical VMEM (capped), safe 48 MiB fallback."""
    try:
        cap = getattr(pltpu.get_tpu_info(), "vmem_capacity_bytes", None)
        if cap:
            return min(int(cap) * 3 // 4, 112 * 1024 * 1024)
    except Exception:
        pass
    return 48 * 1024 * 1024


def _choose_tn(batch, n_tokens, nsp, score_budget_bytes):
    """Token tile: largest multiple of 128 (<= 1024) whose f32 score intermediates
    (f and p, TN*NSp*4 bytes each) fit the budget, then shrunk until the grid has
    >= 4 steps so megacore/parallel sharding has work for every TensorCore."""
    tn = 1024
    while tn > 128 and 2 * tn * nsp * 4 > score_budget_bytes:
        tn //= 2
    while tn > 128 and batch * math.ceil(n_tokens / tn) < 4:
        tn //= 2
    return tn


# ----------------------------- Pallas kernel -------------------------------

def _nonlocal_attn_kernel(theta_ref, phi_ref, g_ref, x_ref, wf_ref, bf_ref, mask_ref,
                          o_ref, *, apply_mask):
    theta = theta_ref[0]            # (ICs, TN)   bf16  (channels-major)
    phi = theta_ref.dtype and phi_ref[0]   # (ICs, NSp) bf16
    g = g_ref[0]                    # (ICs, NSp)  bf16

    # scores f[t, s] = sum_c theta[c, t] * phi[c, s]  -- transposed-LHS MXU matmul,
    # contraction over the (small, sublane-packed) channel axis, f32 accumulate.
    f = lax.dot_general(theta, phi, (((0,), (0,)), ((), ())),
                        preferred_element_type=jnp.float32)          # (TN, NSp)

    # additive bias row masks zero-padded key columns (statically skipped when
    # Ns is already 128-aligned); one VPU add instead of iota+cmp+select.
    if apply_mask:
        f = f + mask_ref[...]

    # exact softmax over keys; normalization deferred to the output tile.
    f = f - jnp.max(f, axis=-1, keepdims=True)
    p = jnp.exp(f)
    denom = jnp.sum(p, axis=-1, keepdims=True)                       # (TN, 1)

    # y^T[c, t] = sum_s g[c, s] * p[t, s]   (NT matmul, stays channels-major)
    y_t = lax.dot_general(g, p.astype(jnp.bfloat16), (((1,), (1,)), ((), ())),
                          preferred_element_type=jnp.float32)        # (ICs, TN)

    # folded W(1x1 conv) + eval-BN affine: wy[t, o] = sum_c y^T[c, t] * Wf[c, o]
    wy = lax.dot_general(y_t.astype(jnp.bfloat16), wf_ref[...],
                         (((0,), (0,)), ((), ())),
                         preferred_element_type=jnp.float32)         # (TN, Cp)

    wy = wy * pl.reciprocal(denom, approx=False)   # exact; only (TN, 1) elements
    o_ref[0] = wy + bf_ref[...] + x_ref[0]


def nonlocal_attention_pallas(theta, phi, g, x_flat, w_fold, b_fold, mask_row, *,
                              apply_mask, tn, vmem_limit_bytes):
    B, ICs, Np = theta.shape
    NSp = phi.shape[-1]
    Cp = x_flat.shape[-1]
    assert Np % tn == 0

    kernel = functools.partial(_nonlocal_attn_kernel, apply_mask=apply_mask)

    return pl.pallas_call(
        kernel,
        out_shape=jax.ShapeDtypeStruct((B, Np, Cp), jnp.float32),
        grid_spec=pltpu.PrefetchScalarGridSpec(
            num_scalar_prefetch=0,
            grid=(B, Np // tn),
            in_specs=[
                pl.BlockSpec((1, ICs, tn), lambda b, t: (b, 0, t)),    # theta (token-tiled)
                pl.BlockSpec((1, ICs, NSp), lambda b, t: (b, 0, 0)),   # phi   (resident / batch)
                pl.BlockSpec((1, ICs, NSp), lambda b, t: (b, 0, 0)),   # g     (resident / batch)
                pl.BlockSpec((1, tn, Cp), lambda b, t: (b, t, 0)),     # x residual (token-tiled)
                pl.BlockSpec((ICs, Cp), lambda b, t: (0, 0)),          # folded W   (resident)
                pl.BlockSpec((1, Cp), lambda b, t: (0, 0)),            # folded bias (resident)
                pl.BlockSpec((1, NSp), lambda b, t: (0, 0)),           # key-pad bias row
            ],
            out_specs=pl.BlockSpec((1, tn, Cp), lambda b, t: (b, t, 0)),
        ),
        compiler_params=pltpu.CompilerParams(
            dimension_semantics=("parallel", "parallel"),
            vmem_limit_bytes=vmem_limit_bytes),
    )(theta, phi, g, x_flat, w_fold, b_fold, mask_row)


# ------------------------------ JAX glue ------------------------------------

def conv1x1_nchw(x, w, b):
    # x: (B, C_in, H, W), w: (C_out, C_in), b: (C_out,)
    return jnp.einsum('oc,bchw->bohw', w, x) + b[None, :, None, None]


def maxpool2d_nchw(x, k):
    return lax.reduce_window(x, -jnp.inf, lax.max,
                             (1, 1, k, k), (1, 1, k, k), 'VALID')


def nonlocal_block_forward(x, params, sub_sample=4):
    """x: (B, C, H, W) NCHW float32, mode='embedded_gaussian' (eval-mode BN folded)."""
    B, C, H, W = x.shape
    IC = params['g_w'].shape[0]
    N = H * W

    ICs = _round_up(IC, 16)      # bf16 sublane granule only (contraction dim stays small)
    Cp = _round_up(C, 128)       # lane-dense output channels -> unmasked vst stores

    # pad projection weights/biases once so the 1x1 convs emit ICs-channel operands directly
    def pad_proj(w, b):
        wp = jnp.zeros((ICs, C), jnp.float32).at[:IC, :].set(w)
        bp = jnp.zeros((ICs,), jnp.float32).at[:IC].set(b)
        return wp, bp

    tw, tb = pad_proj(params['th_w'], params['th_b'])
    pw, pb = pad_proj(params['ph_w'], params['ph_b'])
    gw, gb = pad_proj(params['g_w'], params['g_b'])

    # theta projection straight to the kernel's channels-major (B, ICs, N) layout
    x_cn = x.reshape(B, C, N)
    theta = jnp.einsum('oc,bcn->bon', tw, x_cn) + tb[None, :, None]      # (B, ICs, N)

    # phi / g: 1x1 conv -> 4x4 maxpool -> (B, ICs, Ns)  (cheap linear prologue in XLA)
    def proj_pool(w, b):
        feat = maxpool2d_nchw(conv1x1_nchw(x, w, b), sub_sample)
        return feat.reshape(B, ICs, -1)
    phi = proj_pool(pw, pb)
    g_x = proj_pool(gw, gb)
    Ns = phi.shape[-1]
    NSp = _round_up(Ns, 128)

    vmem_budget = _vmem_budget_bytes()
    TN = _choose_tn(B, N, NSp, score_budget_bytes=vmem_budget // 4)
    Np = _round_up(N, TN)

    theta_p = jnp.pad(theta, ((0, 0), (0, 0), (0, Np - N))).astype(jnp.bfloat16)
    phi_p = jnp.pad(phi, ((0, 0), (0, 0), (0, NSp - Ns))).astype(jnp.bfloat16)
    g_p = jnp.pad(g_x, ((0, 0), (0, 0), (0, NSp - Ns))).astype(jnp.bfloat16)

    # residual input in token-major (B, N, C), matching the kernel's output tile layout
    x_flat = x_cn.transpose(0, 2, 1)
    x_p = jnp.pad(x_flat, ((0, 0), (0, Np - N), (0, Cp - C))).astype(jnp.float32)

    # fold W (1x1 conv: IC -> C) and eval-mode BatchNorm into one affine:
    #   out = ((y @ W^T + b) - mean) / sqrt(var+eps) * gamma + beta
    eps = 1e-5
    scale = params['bn_gamma'] / jnp.sqrt(params['bn_var'] + eps)               # (C,)
    w_fold = params['W_w'].T * scale[None, :]                                   # (IC, C)
    b_fold = (params['W_b'] - params['bn_mean']) * scale + params['bn_beta']    # (C,)
    w_p = jnp.zeros((ICs, Cp), jnp.float32).at[:IC, :C].set(w_fold).astype(jnp.bfloat16)
    b_p = jnp.zeros((1, Cp), jnp.float32).at[0, :C].set(b_fold)

    # additive key-padding bias row: 0 for valid key columns, -1e30 for zero padding
    mask_row = jnp.where(jnp.arange(NSp) < Ns, 0.0, -1e30).astype(jnp.float32)[None, :]

    z = nonlocal_attention_pallas(theta_p, phi_p, g_p, x_p, w_p, b_p, mask_row,
                                  apply_mask=(NSp != Ns), tn=TN,
                                  vmem_limit_bytes=vmem_budget)

    # strip padding, back to NCHW (the token-major <-> NCHW transposes stay in XLA;
    # a channels-major kernel output would need an in-kernel XLU transpose -- left out
    # to keep the lowering simple and proven).
    z = z[:, :N, :C]
    return z.transpose(0, 2, 1).reshape(B, C, H, W)


def reference_forward(x, params, sub_sample=4):
    """Pure-JAX f32 reference of the same forward (sanity check)."""
    B, C, H, W = x.shape
    IC = params['g_w'].shape[0]
    g_feat = maxpool2d_nchw(conv1x1_nchw(x, params['g_w'], params['g_b']), sub_sample)
    Ns = g_feat.shape[2] * g_feat.shape[3]
    g_x = g_feat.reshape(B, IC, Ns).transpose(0, 2, 1)
    theta_x = conv1x1_nchw(x, params['th_w'], params['th_b']).reshape(B, IC, -1).transpose(0, 2, 1)
    phi_x = maxpool2d_nchw(conv1x1_nchw(x, params['ph_w'], params['ph_b']), sub_sample).reshape(B, IC, Ns)
    f = jnp.einsum('bnc,bcm->bnm', theta_x, phi_x)
    f = jax.nn.softmax(f, axis=-1)
    y = jnp.einsum('bnm,bmc->bnc', f, g_x)                               # (B, N, IC)
    y_nchw = y.transpose(0, 2, 1).reshape(B, IC, H, W)
    wy = conv1x1_nchw(y_nchw, params['W_w'], params['W_b'])
    eps = 1e-5
    scale = params['bn_gamma'] / jnp.sqrt(params['bn_var'] + eps)
    wy = (wy - params['bn_mean'][None, :, None, None]) * scale[None, :, None, None] \
         + params['bn_beta'][None, :, None, None]
    return wy + x


# ------------------------------ Parameters ----------------------------------

def make_params(key, in_channels, inter_channels):
    ks = jax.random.split(key, 8)
    scale = 0.1
    # NOTE: the PyTorch module zero-inits the BN affine but then re-runs
    # init_weights(kaiming) over all children; we use deterministic non-zero values so
    # the kernel path is actually exercised (eval-mode BN, running stats 0/1).
    return {
        'g_w':  scale * jax.random.normal(ks[0], (inter_channels, in_channels), jnp.float32),
        'g_b':  scale * jax.random.normal(ks[1], (inter_channels,), jnp.float32),
        'th_w': scale * jax.random.normal(ks[2], (inter_channels, in_channels), jnp.float32),
        'th_b': scale * jax.random.normal(ks[3], (inter_channels,), jnp.float32),
        'ph_w': scale * jax.random.normal(ks[4], (inter_channels, in_channels), jnp.float32),
        'ph_b': scale * jax.random.normal(ks[5], (inter_channels,), jnp.float32),
        'W_w':  scale * jax.random.normal(ks[6], (in_channels, inter_channels), jnp.float32),
        'W_b':  scale * jax.random.normal(ks[7], (in_channels,), jnp.float32),
        'bn_gamma': jnp.ones((in_channels,), jnp.float32),
        'bn_beta':  jnp.zeros((in_channels,), jnp.float32),
        'bn_mean':  jnp.zeros((in_channels,), jnp.float32),
        'bn_var':   jnp.ones((in_channels,), jnp.float32),
    }


if __name__ == "__main__":
    B, C, H, W = 2, 4, 16, 16
    inter = C // 2                     # inter_channels = in_channels // 2
    key = jax.random.PRNGKey(0)
    kx, kp = jax.random.split(key)
    x = jax.random.normal(kx, (B, C, H, W), jnp.float32)
    params = make_params(kp, C, inter)

    out = nonlocal_block_forward(x, params, sub_sample=4)
    out = jax.block_until_ready(out)

    ref = reference_forward(x, params, sub_sample=4)
    assert out.shape == (B, C, H, W)
    # bf16 MXU operands -> looser tolerance than the pure-f32 reference path
    assert jnp.max(jnp.abs(out - ref)) < 1e-2, "mismatch vs reference"
    print("KERNEL_OK")
</pallas_src>

<mosaic_0001>
module attributes {stable_mosaic.version = 11 : i64} {
  func.func @_nonlocal_attn_kernel(%arg0: i32, %arg1: i32, %arg2: memref<1x16x128xbf16, #tpu.memory_space<vmem>>, %arg3: memref<1x16x128xbf16, #tpu.memory_space<vmem>>, %arg4: memref<1x16x128xbf16, #tpu.memory_space<vmem>>, %arg5: memref<1x128x128xf32, #tpu.memory_space<vmem>>, %arg6: memref<16x128xbf16, #tpu.memory_space<vmem>>, %arg7: memref<1x128xf32, #tpu.memory_space<vmem>>, %arg8: memref<1x128xf32, #tpu.memory_space<vmem>>, %arg9: memref<1x128x128xf32, #tpu.memory_space<vmem>>) attributes {dimension_semantics = [#tpu.dimension_semantics<parallel>, #tpu.dimension_semantics<parallel>], iteration_bounds = array<i64: 2, 2>, scalar_prefetch = 0 : i64, scratch_operands = 0 : i64, tpu.core_type = #tpu.core_type<tc>, window_params = [{transform_indices = @transform_0, window_bounds = array<i64: 1, 16, 128>}, {transform_indices = @transform_1, window_bounds = array<i64: 1, 16, 128>}, {transform_indices = @transform_2, window_bounds = array<i64: 1, 16, 128>}, {transform_indices = @transform_3, window_bounds = array<i64: 1, 128, 128>}, {pipeline_mode = #tpu.pipeline_mode<synchronous>, transform_indices = @transform_4, window_bounds = array<i64: 16, 128>}, {pipeline_mode = #tpu.pipeline_mode<synchronous>, transform_indices = @transform_5, window_bounds = array<i64: 1, 128>}, {pipeline_mode = #tpu.pipeline_mode<synchronous>, transform_indices = @transform_6, window_bounds = array<i64: 1, 128>}, {transform_indices = @transform_7, window_bounds = array<i64: 1, 128, 128>}]} {
    %c0 = arith.constant 0 : index
    %c0_0 = arith.constant 0 : index
    %c0_1 = arith.constant 0 : index
    %0 = vector.load %arg2[%c0, %c0_0, %c0_1] : memref<1x16x128xbf16, #tpu.memory_space<vmem>>, vector<1x16x128xbf16>
    %1 = vector.shape_cast %0 : vector<1x16x128xbf16> to vector<16x128xbf16>
    %c0_2 = arith.constant 0 : index
    %c0_3 = arith.constant 0 : index
    %c0_4 = arith.constant 0 : index
    %2 = vector.load %arg3[%c0_2, %c0_3, %c0_4] : memref<1x16x128xbf16, #tpu.memory_space<vmem>>, vector<1x16x128xbf16>
    %3 = vector.shape_cast %2 : vector<1x16x128xbf16> to vector<16x128xbf16>
    %c0_5 = arith.constant 0 : index
    %c0_6 = arith.constant 0 : index
    %c0_7 = arith.constant 0 : index
    %4 = vector.load %arg4[%c0_5, %c0_6, %c0_7] : memref<1x16x128xbf16, #tpu.memory_space<vmem>>, vector<1x16x128xbf16>
    %5 = vector.shape_cast %4 : vector<1x16x128xbf16> to vector<16x128xbf16>
    %cst = arith.constant dense<0.000000e+00> : vector<128x128xf32>
    %6 = tpu.matmul %1, %3, %cst {dimension_numbers = #tpu.dot_dimension_numbers<[0], [0], [1], [1], [0, 1, 1, 1], [], []>} : vector<16x128xbf16>, vector<16x128xbf16>, vector<128x128xf32> -> vector<128x128xf32>
    %c0_8 = arith.constant 0 : index
    %c0_9 = arith.constant 0 : index
    %7 = vector.load %arg8[%c0_8, %c0_9] : memref<1x128xf32, #tpu.memory_space<vmem>>, vector<1x128xf32>
    %8 = vector.broadcast %7 : vector<1x128xf32> to vector<128x128xf32>
    %9 = arith.addf %6, %8 : vector<128x128xf32>
    %cst_10 = arith.constant dense<0xFF800000> : vector<128xf32>
    %10 = vector.multi_reduction <maximumf>, %9, %cst_10 [1] : vector<128x128xf32> to vector<128xf32>
    %11 = vector.shape_cast %10 : vector<128xf32> to vector<128x1xf32>
    %12 = vector.broadcast %11 : vector<128x1xf32> to vector<128x128xf32>
    %13 = arith.subf %9, %12 : vector<128x128xf32>
    %14 = math.exp %13 : vector<128x128xf32>
    %cst_11 = arith.constant dense<0.000000e+00> : vector<128xf32>
    %15 = vector.multi_reduction <add>, %14, %cst_11 [1] : vector<128x128xf32> to vector<128xf32>
    %16 = vector.shape_cast %15 : vector<128xf32> to vector<128x1xf32>
    %17 = arith.truncf %14 : vector<128x128xf32> to vector<128x128xbf16>
    %cst_12 = arith.constant dense<0.000000e+00> : vector<16x128xf32>
    %18 = tpu.matmul %5, %17, %cst_12 {dimension_numbers = #tpu.dot_dimension_numbers<[1], [1], [0], [0], [0, 0, 1, 0], [], []>} : vector<16x128xbf16>, vector<128x128xbf16>, vector<16x128xf32> -> vector<16x128xf32>
    %19 = arith.truncf %18 : vector<16x128xf32> to vector<16x128xbf16>
    %c0_13 = arith.constant 0 : index
    %c0_14 = arith.constant 0 : index
    %20 = vector.load %arg6[%c0_13, %c0_14] : memref<16x128xbf16, #tpu.memory_space<vmem>>, vector<16x128xbf16>
    %cst_15 = arith.constant dense<0.000000e+00> : vector<128x128xf32>
    %21 = tpu.matmul %19, %20, %cst_15 {dimension_numbers = #tpu.dot_dimension_numbers<[0], [0], [1], [1], [0, 1, 1, 1], [], []>} : vector<16x128xbf16>, vector<16x128xbf16>, vector<128x128xf32> -> vector<128x128xf32>
    %22 = tpu.reciprocal %16 : vector<128x1xf32> -> vector<128x1xf32>
    %23 = vector.broadcast %22 : vector<128x1xf32> to vector<128x128xf32>
    %24 = arith.mulf %21, %23 : vector<128x128xf32>
    %c0_16 = arith.constant 0 : index
    %c0_17 = arith.constant 0 : index
    %25 = vector.load %arg7[%c0_16, %c0_17] : memref<1x128xf32, #tpu.memory_space<vmem>>, vector<1x128xf32>
    %26 = vector.broadcast %25 : vector<1x128xf32> to vector<128x128xf32>
    %27 = arith.addf %24, %26 : vector<128x128xf32>
    %c0_18 = arith.constant 0 : index
    %c0_19 = arith.constant 0 : index
    %c0_20 = arith.constant 0 : index
    %28 = vector.load %arg5[%c0_18, %c0_19, %c0_20] : memref<1x128x128xf32, #tpu.memory_space<vmem>>, vector<1x128x128xf32>
    %29 = vector.shape_cast %28 : vector<1x128x128xf32> to vector<128x128xf32>
    %30 = arith.addf %27, %29 : vector<128x128xf32>
    %c0_21 = arith.constant 0 : index
    %c0_22 = arith.constant 0 : index
    %c0_23 = arith.constant 0 : index
    %31 = vector.load %arg9[%c0_21, %c0_22, %c0_23] : memref<1x128x128xf32, #tpu.memory_space<vmem>>, vector<1x128x128xf32>
    %32 = vector.shape_cast %31 : vector<1x128x128xf32> to vector<128x128xf32>
    %33 = vector.shape_cast %30 : vector<128x128xf32> to vector<1x128x128xf32>
    tpu.vector_store %arg9[%c0_21, %c0_22, %c0_23], %33 {strides = array<i32>} : memref<1x128x128xf32, #tpu.memory_space<vmem>>, vector<1x128x128xf32>,
    return
  }
  func.func @transform_0(%arg0: i32, %arg1: i32) -> (i32, i32, i32) {
    %c0_i32 = arith.constant 0 : i32
    %c0_i32_0 = arith.constant 0 : i32
    return %arg0, %c0_i32, %arg1 : i32, i32, i32
  }
  func.func @transform_1(%arg0: i32, %arg1: i32) -> (i32, i32, i32) {
    %c0_i32 = arith.constant 0 : i32
    %c0_i32_0 = arith.constant 0 : i32
    %c0_i32_1 = arith.constant 0 : i32
    return %arg0, %c0_i32, %c0_i32_0 : i32, i32, i32
  }
  func.func @transform_2(%arg0: i32, %arg1: i32) -> (i32, i32, i32) {
    %c0_i32 = arith.constant 0 : i32
    %c0_i32_0 = arith.constant 0 : i32
    %c0_i32_1 = arith.constant 0 : i32
    return %arg0, %c0_i32, %c0_i32_0 : i32, i32, i32
  }
  func.func @transform_3(%arg0: i32, %arg1: i32) -> (i32, i32, i32) {
    %c0_i32 = arith.constant 0 : i32
    %c0_i32_0 = arith.constant 0 : i32
    return %arg0, %arg1, %c0_i32 : i32, i32, i32
  }
  func.func @transform_4(%arg0: i32, %arg1: i32) -> (i32, i32) {
    %c0_i32 = arith.constant 0 : i32
    %c0_i32_0 = arith.constant 0 : i32
    %c0_i32_1 = arith.constant 0 : i32
    return %c0_i32, %c0_i32_0 : i32, i32
  }
  func.func @transform_5(%arg0: i32, %arg1: i32) -> (i32, i32) {
    %c0_i32 = arith.constant 0 : i32
    %c0_i32_0 = arith.constant 0 : i32
    %c0_i32_1 = arith.constant 0 : i32
    return %c0_i32, %c0_i32_0 : i32, i32
  }
  func.func @transform_6(%arg0: i32, %arg1: i32) -> (i32, i32) {
    %c0_i32 = arith.constant 0 : i32
    %c0_i32_0 = arith.constant 0 : i32
    %c0_i32_1 = arith.constant 0 : i32
    return %c0_i32, %c0_i32_0 : i32, i32
  }
  func.func @transform_7(%arg0: i32, %arg1: i32) -> (i32, i32, i32) {
    %c0_i32 = arith.constant 0 : i32
    %c0_i32_0 = arith.constant 0 : i32
    return %arg0, %arg1, %c0_i32 : i32, i32, i32
  }
}

</mosaic_0001>

<llo_original>
// kernel: tpu_custom_call.1
$region0: #{tpu_custom_call.1}
  #allocation0 [shape = 'u32[]', space=smem, size = 0x4, offset = 0x4, fixed_abs, tag = 'smem constant byte address 0x4 - core index']
  #allocation1 [shape = 'u32[72,128]{1,0:T(1,128)}', space=vmem, size = 0x9000, scoped, tag = 'internal scratch']
  %s0 = inlined_call_operand.hbm [shape: bf16[2,16,256], index: 0, kind: input, shape index: {}]
  %s1 = inlined_call_operand.hbm [shape: bf16[2,16,128], index: 1, kind: input, shape index: {}]
  %s2 = inlined_call_operand.hbm [shape: bf16[2,16,128], index: 2, kind: input, shape index: {}]
  %s3 = inlined_call_operand.hbm [shape: f32[2,256,128], index: 3, kind: input, shape index: {}]
  %s4 = inlined_call_operand.hbm [shape: bf16[16,128], index: 4, kind: input, shape index: {}]
  %s5 = inlined_call_operand.vmem [shape: f32[1,128], index: 5, kind: input, shape index: {}]
  %s6 = inlined_call_operand.vmem [shape: f32[1,128], index: 6, kind: input, shape index: {}]
  %s7 = inlined_call_operand.hbm [shape: f32[2,256,128], index: 7, kind: output, shape index: {}]
  %s8 = sld [smem:[#allocation0]]
  $region81: #{tpu_custom_call.1} parent=0
    _
  %s10 = ssub.s32 1, %s8
  %s11 = scalar_select 0, %s10, %s8
  $region1: #{tpu_custom_call.1} parent=0
    #allocation2 [shape = 'u8[8192]{0}', space=vmem, size = 0x2000, scoped, tag = 'input window, operand 0']
    #allocation3 [shape = 's32[2]{0}', space=sflag, size = 0x8, scoped, tag = 'scoped memory for tpu_custom_call.1']
    #allocation4 [shape = 's32[2]{0}', space=sflag, size = 0x8, scoped, tag = 'scoped memory for tpu_custom_call.1']
    #allocation5 [shape = 'u8[8192]{0}', space=vmem, size = 0x2000, scoped, tag = 'input window, operand 1']
    #allocation6 [shape = 's32[2]{0}', space=sflag, size = 0x8, scoped, tag = 'scoped memory for tpu_custom_call.1']
    #allocation7 [shape = 'u8[8192]{0}', space=vmem, size = 0x2000, scoped, tag = 'input window, operand 2']
    #allocation8 [shape = 'u8[131072]{0}', space=vmem, size = 0x20000, scoped, tag = 'input window, operand 3']
    #allocation9 [shape = 's32[2]{0}', space=sflag, size = 0x8, scoped, tag = 'scoped memory for tpu_custom_call.1']
    #allocation10 [shape = 'u8[4096]{0}', space=vmem, size = 0x1000, scoped, tag = 'input window, operand 4, single buffered']
    #allocation11 [shape = 'u8[131072]{0}', space=vmem, size = 0x20000, scoped, tag = 'output window, operand 0']
    %12 = vsyncpa [#allocation3], 0
    %s13 = scalar_lea.sflag [#allocation3], 1
    %14 = vsyncpa %s13, 0
    %15 = vsyncpa [#allocation6], 0
    %s16 = scalar_lea.sflag [#allocation6], 1
    %17 = vsyncpa %s16, 0
    %18 = vsyncpa [#allocation9], 0
    %s19 = scalar_lea.sflag [#allocation9], 1
    %20 = vsyncpa %s19, 0
    %21 = vsyncpa [#allocation4], 0
    %s22 = scalar_lea.sflag [#allocation4], 1
    %23 = vsyncpa %s22, 0
    loop: start=0, step=1, limit=6
    $region2: #{tpu_custom_call.1} parent=1 // loop_pre_header
      _
    $region3: #{tpu_custom_call.1} parent=1 // loop_header
      %s25 = sphi 0, %s29
      %p26 = scmp.ge.s32.totalorder %s25, 6
      %s32 = sphi 0, %s44
      %s33 = sphi 0, %s40
      %s34 = sphi 0, %s32
      %s35 = sphi 0, %s33
      %s36 = sphi 0, %s34
      %s37 = sphi 0, %s35
      %s49 = sphi 0, %s51
      %s52 = sphi 0, %s49
      %s53 = sphi 0, %s52
      %s69 = sphi 0, %s53
      %s75 = sphi 0, %s77
      %s78 = sphi 0, %s75
      %s79 = sphi 0, %s78
      %s95 = sphi 0, %s79
      %s101 = sphi 0, %s103
      %s104 = sphi 0, %s101
      %s105 = sphi 0, %s104
      %s121 = sphi 0, %s105
      %s129 = sphi 0, %s131
      %s132 = sphi 0, %s129
      %s133 = sphi 0, %s132
      %s149 = sphi 0, %s133
      %s153 = sphi 0, %s153
      %s155 = sphi 0, %s153
      %s156 = sphi 0, %s155
      %s170 = sphi 0, %s156
      %s174 = sphi 0, %s174
      %s176 = sphi 0, %s174
      %s177 = sphi 0, %s176
      %s191 = sphi 0, %s177
      %s195 = sphi 0, %s195
      %s197 = sphi 0, %s195
      %s198 = sphi 0, %s197
      %s212 = sphi 0, %s198
      %s220 = sphi 0, %s222
      %s223 = sphi 0, %s220
      %s224 = sphi 0, %s223
      %s240 = sphi 0, %s224
    $region4: #{tpu_custom_call.1} parent=1 // loop_header_branch
      %28 = sbr.rel (%p26) target = $region8
    $region5: #{tpu_custom_call.1} parent=1 // loop_body
      %s30 = ssub.s32 %s25, 1
      %s31 = ssub.s32 %s25, 2
      %s38 = sadd.s32 1, %s33
      %p39 = scmp.ge.s32.totalorder %s38, 2
      %s40 = scalar_select %p39, 0, %s38
      %s41 = sadd.s32 1, %s32
      %s42 = scalar_select %p39, %s41, %s32
      %p43 = scmp.ge.s32.totalorder %s42, 2
      %s44 = scalar_select %p43, 0, %s42
      %s45 = ssub.s32 %s32, %s44
      %s46 = ssub.s32 %s33, %s40
      %s47 = sor.u32 %s45, %s46
      %p48 = scmp.eq.s32.totalorder %s47, 0
      %s50 = sadd.s32 %s49, 1
      %s51 = scalar_select %p48, %s49, %s50
      %p54 = pneg %p48
      %p55 = scmp.eq.s32.totalorder %s25, 3
      %p56 = por %p54, %p55
      %p57 = scmp.ne.s32.totalorder %s49, %s52
      %p58 = scmp.eq.s32.totalorder %s25, 0
      %p59 = por %p57, %p58
      %p60 = scmp.ne.s32.totalorder %s49, %s52
      %p61 = scmp.eq.s32.totalorder %s30, 3
      %p62 = por %p60, %p61
      %p63 = scmp.ne.s32.totalorder %s52, %s53
      %p64 = scmp.eq.s32.totalorder %s30, 0
      %p65 = por %p63, %p64
      %p66 = scmp.ne.s32.totalorder %s52, %s53
      %p67 = scmp.eq.s32.totalorder %s31, 3
      %p68 = por %p66, %p67
      %p70 = scmp.ne.s32.totalorder %s53, %s69
      %p71 = scmp.eq.s32.totalorder %s31, 0
      %p72 = por %p70, %p71
      %s73 = ssub.s32 %s32, %s44
      %p74 = scmp.eq.s32.totalorder %s73, 0
      %s76 = sadd.s32 %s75, 1
      %s77 = scalar_select %p74, %s75, %s76
      %p80 = pneg %p74
      %p81 = scmp.eq.s32.totalorder %s25, 3
      %p82 = por %p80, %p81
      %p83 = scmp.ne.s32.totalorder %s75, %s78
      %p84 = scmp.eq.s32.totalorder %s25, 0
      %p85 = por %p83, %p84
      %p86 = scmp.ne.s32.totalorder %s75, %s78
      %p87 = scmp.eq.s32.totalorder %s30, 3
      %p88 = por %p86, %p87
      %p89 = scmp.ne.s32.totalorder %s78, %s79
      %p90 = scmp.eq.s32.totalorder %s30, 0
      %p91 = por %p89, %p90
      %p92 = scmp.ne.s32.totalorder %s78, %s79
      %p93 = scmp.eq.s32.totalorder %s31, 3
      %p94 = por %p92, %p93
      %p96 = scmp.ne.s32.totalorder %s79, %s95
      %p97 = scmp.eq.s32.totalorder %s31, 0
      %p98 = por %p96, %p97
      %s99 = ssub.s32 %s32, %s44
      %p100 = scmp.eq.s32.totalorder %s99, 0
      %s102 = sadd.s32 %s101, 1
      %s103 = scalar_select %p100, %s101, %s102
      %p106 = pneg %p100
      %p107 = scmp.eq.s32.totalorder %s25, 3
      %p108 = por %p106, %p107
      %p109 = scmp.ne.s32.totalorder %s101, %s104
      %p110 = scmp.eq.s32.totalorder %s25, 0
      %p111 = por %p109, %p110
      %p112 = scmp.ne.s32.totalorder %s101, %s104
      %p113 = scmp.eq.s32.totalorder %s30, 3
      %p114 = por %p112, %p113
      %p115 = scmp.ne.s32.totalorder %s104, %s105
      %p116 = scmp.eq.s32.totalorder %s30, 0
      %p117 = por %p115, %p116
      %p118 = scmp.ne.s32.totalorder %s104, %s105
      %p119 = scmp.eq.s32.totalorder %s31, 3
      %p120 = por %p118, %p119
      %p122 = scmp.ne.s32.totalorder %s105, %s121
      %p123 = scmp.eq.s32.totalorder %s31, 0
      %p124 = por %p122, %p123
      %s125 = ssub.s32 %s32, %s44
      %s126 = ssub.s32 %s33, %s40
      %s127 = sor.u32 %s125, %s126
      %p128 = scmp.eq.s32.totalorder %s127, 0
      %s130 = sadd.s32 %s129, 1
      %s131 = scalar_select %p128, %s129, %s130
      %p134 = pneg %p128
      %p135 = scmp.eq.s32.totalorder %s25, 3
      %p136 = por %p134, %p135
      %p137 = scmp.ne.s32.totalorder %s129, %s132
      %p138 = scmp.eq.s32.totalorder %s25, 0
      %p139 = por %p137, %p138
      %p140 = scmp.ne.s32.totalorder %s129, %s132
      %p141 = scmp.eq.s32.totalorder %s30, 3
      %p142 = por %p140, %p141
      %p143 = scmp.ne.s32.totalorder %s132, %s133
      %p144 = scmp.eq.s32.totalorder %s30, 0
      %p145 = por %p143, %p144
      %p146 = scmp.ne.s32.totalorder %s132, %s133
      %p147 = scmp.eq.s32.totalorder %s31, 3
      %p148 = por %p146, %p147
      %p150 = scmp.ne.s32.totalorder %s133, %s149
      %p151 = scmp.eq.s32.totalorder %s31, 0
      %p152 = por %p150, %p151
      %s154 = sadd.s32 %s153, 1
      %p157 = scmp.eq.s32.totalorder %s25, 3
      %p158 = scmp.ne.s32.totalorder %s153, %s155
      %p159 = scmp.eq.s32.totalorder %s25, 0
      %p160 = por %p158, %p159
      %p161 = scmp.ne.s32.totalorder %s153, %s155
      %p162 = scmp.eq.s32.totalorder %s30, 3
      %p163 = por %p161, %p162
      %p164 = scmp.ne.s32.totalorder %s155, %s156
      %p165 = scmp.eq.s32.totalorder %s30, 0
      %p166 = por %p164, %p165
      %p167 = scmp.ne.s32.totalorder %s155, %s156
      %p168 = scmp.eq.s32.totalorder %s31, 3
      %p169 = por %p167, %p168
      %p171 = scmp.ne.s32.totalorder %s156, %s170
      %p172 = scmp.eq.s32.totalorder %s31, 0
      %p173 = por %p171, %p172
      %s175 = sadd.s32 %s174, 1
      %p178 = scmp.eq.s32.totalorder %s25, 3
      %p179 = scmp.ne.s32.totalorder %s174, %s176
      %p180 = scmp.eq.s32.totalorder %s25, 0
      %p181 = por %p179, %p180
      %p182 = scmp.ne.s32.totalorder %s174, %s176
      %p183 = scmp.eq.s32.totalorder %s30, 3
      %p184 = por %p182, %p183
      %p185 = scmp.ne.s32.totalorder %s176, %s177
      %p186 = scmp.eq.s32.totalorder %s30, 0
      %p187 = por %p185, %p186
      %p188 = scmp.ne.s32.totalorder %s176, %s177
      %p189 = scmp.eq.s32.totalorder %s31, 3
      %p190 = por %p188, %p189
      %p192 = scmp.ne.s32.totalorder %s177, %s191
      %p193 = scmp.eq.s32.totalorder %s31, 0
      %p194 = por %p192, %p193
      %s196 = sadd.s32 %s195, 1
      %p199 = scmp.eq.s32.totalorder %s25, 3
      %p200 = scmp.ne.s32.totalorder %s195, %s197
      %p201 = scmp.eq.s32.totalorder %s25, 0
      %p202 = por %p200, %p201
      %p203 = scmp.ne.s32.totalorder %s195, %s197
      %p204 = scmp.eq.s32.totalorder %s30, 3
      %p205 = por %p203, %p204
      %p206 = scmp.ne.s32.totalorder %s197, %s198
      %p207 = scmp.eq.s32.totalorder %s30, 0
      %p208 = por %p206, %p207
      %p209 = scmp.ne.s32.totalorder %s197, %s198
      %p210 = scmp.eq.s32.totalorder %s31, 3
      %p211 = por %p209, %p210
      %p213 = scmp.ne.s32.totalorder %s198, %s212
      %p214 = scmp.eq.s32.totalorder %s31, 0
      %p215 = por %p213, %p214
      %s216 = ssub.s32 %s32, %s44
      %s217 = ssub.s32 %s33, %s40
      %s218 = sor.u32 %s216, %s217
      %p219 = scmp.eq.s32.totalorder %s218, 0
      %s221 = sadd.s32 %s220, 1
      %s222 = scalar_select %p219, %s220, %s221
      %p225 = pneg %p219
      %p226 = scmp.eq.s32.totalorder %s25, 3
      %p227 = por %p225, %p226
      %p228 = scmp.ne.s32.totalorder %s220, %s223
      %p229 = scmp.eq.s32.totalorder %s25, 0
      %p230 = por %p228, %p229
      %p231 = scmp.ne.s32.totalorder %s220, %s223
      %p232 = scmp.eq.s32.totalorder %s30, 3
      %p233 = por %p231, %p232
      %p234 = scmp.ne.s32.totalorder %s223, %s224
      %p235 = scmp.eq.s32.totalorder %s30, 0
      %p236 = por %p234, %p235
      %p237 = scmp.ne.s32.totalorder %s223, %s224
      %p238 = scmp.eq.s32.totalorder %s31, 3
      %p239 = por %p237, %p238
      %p241 = scmp.ne.s32.totalorder %s224, %s240
      %p242 = scmp.eq.s32.totalorder %s31, 0
      %p243 = por %p241, %p242
      %p244 = scmp.le.s32.totalorder 1, %s25
      %p245 = scmp.lt.s32.totalorder %s25, 5
      %p246 = pnand %p244, %p245
      %p247 = pneg %p246
      // Predicated region
      $region9: #{tpu_custom_call.1} parent=5 // pred_check
        _
      $region10: #{tpu_custom_call.1} parent=5 // pred_check_branch
        %249 = sbr.rel (%p246) target = $region12
      $region11: #{tpu_custom_call.1} parent=5 // pred_region
        %s250 = ssub.s32 %s25, 1
        // Predicated region
        $region13: #{tpu_custom_call.1} parent=11 // pred_check
          %p251 = pneg %p166
        $region14: #{tpu_custom_call.1} parent=11 // pred_check_branch
          %253 = sbr.rel (%p251) target = $region16
        $region15: #{tpu_custom_call.1} parent=11 // pred_region
          %255 = vsyncadd [#allocation9], 0
          %s256 = sshll.u32 %s4, 4
          %s257 = int_to_ptr.hbm [resolvable:$true] %s256
          %s258 = sshll.u32 [#allocation10], 4
          %s259 = int_to_ptr.vmem [resolvable:$true] %s258
          %264 = dma.hbm_to_vmem [thread:$0]  %s257, 128, %s259, [#allocation9], 64, 64, 4
        $region16: #{tpu_custom_call.1} parent=11 // pred_fallthru
          _
        // Predicated region
        $region17: #{tpu_custom_call.1} parent=11 // pred_check
          %p265 = pneg %p187
        $region18: #{tpu_custom_call.1} parent=11 // pred_check_branch
          %267 = sbr.rel (%p265) target = $region20
        $region19: #{tpu_custom_call.1} parent=11 // pred_region
          _
        $region20: #{tpu_custom_call.1} parent=11 // pred_fallthru
          _
        // Predicated region
        $region21: #{tpu_custom_call.1} parent=11 // pred_check
          %p268 = pneg %p208
        $region22: #{tpu_custom_call.1} parent=11 // pred_check_branch
          %270 = sbr.rel (%p268) target = $region24
        $region23: #{tpu_custom_call.1} parent=11 // pred_region
          _
        $region24: #{tpu_custom_call.1} parent=11 // pred_fallthru
          _
      $region12: #{tpu_custom_call.1} parent=5 // pred_fallthru
        _
      %p271 = scmp.lt.s32.totalorder %s25, 4
      // Predicated region
      $region25: #{tpu_custom_call.1} parent=5 // pred_check
        %p272 = pneg %p271
      $region26: #{tpu_custom_call.1} parent=5 // pred_check_branch
        %274 = sbr.rel (%p272) target = $region28
      $region27: #{tpu_custom_call.1} parent=5 // pred_region
        // Predicated region
        $region29: #{tpu_custom_call.1} parent=27 // pred_check
          %p275 = pneg %p59
        $region30: #{tpu_custom_call.1} parent=27 // pred_check_branch
          %277 = sbr.rel (%p275) target = $region32
        $region31: #{tpu_custom_call.1} parent=27 // pred_region
          %s278 = sand.u32 %s49, 1
          %s279 = scalar_lea.sflag [#allocation3], %s278
          %s280 = sand.u32 %s49, 1
          %s281 = smul.addr %s280, 8
          %s282 = scalar_lea.vmem [#allocation2], %s281
          %284 = vsyncadd %s279, 0
          %s285 = smul.addr %s32, 4
          %s286 = sadd.s32 %s33, %s285
          %s287 = smul.addr %s286, 4
          %s288 = scalar_lea.hbm %s0, %s287
          %s289 = sshll.u32 %s288, 4
          %s290 = int_to_ptr.hbm [resolvable:$true] %s289
          %s291 = sshll.u32 %s282, 4
          %s292 = int_to_ptr.vmem [resolvable:$true] %s291
          %297 = dma.hbm_to_vmem [thread:$0]  %s290, 128, %s292, %s279, 128, 64, 4
        $region32: #{tpu_custom_call.1} parent=27 // pred_fallthru
          _
        // Predicated region
        $region33: #{tpu_custom_call.1} parent=27 // pred_check
          %p298 = pneg %p85
        $region34: #{tpu_custom_call.1} parent=27 // pred_check_branch
          %300 = sbr.rel (%p298) target = $region36
        $region35: #{tpu_custom_call.1} parent=27 // pred_region
          %s301 = sand.u32 %s25, 1
          %s302 = scalar_lea.sflag [#allocation6], %s301
          %s303 = sand.u32 %s75, 1
          %s304 = smul.addr %s303, 8
          %s305 = scalar_lea.vmem [#allocation5], %s304
          %307 = vsyncadd %s302, 0
          %s308 = smul.addr %s32, 2
          %s309 = smul.addr %s308, 4
          %s310 = scalar_lea.hbm %s1, %s309
          %s311 = sshll.u32 %s310, 4
          %s312 = int_to_ptr.hbm [resolvable:$true] %s311
          %s313 = sshll.u32 %s305, 4
          %s314 = int_to_ptr.vmem [resolvable:$true] %s313
          %319 = dma.hbm_to_vmem [thread:$0]  %s312, 128, %s314, %s302, 64, 64, 4
        $region36: #{tpu_custom_call.1} parent=27 // pred_fallthru
          _
        // Predicated region
        $region37: #{tpu_custom_call.1} parent=27 // pred_check
          %p320 = pneg %p111
        $region38: #{tpu_custom_call.1} parent=27 // pred_check_branch
          %322 = sbr.rel (%p320) target = $region40
        $region39: #{tpu_custom_call.1} parent=27 // pred_region
          %s323 = sand.u32 %s25, 1
          %s324 = scalar_lea.sflag [#allocation6], %s323
          %s325 = sand.u32 %s101, 1
          %s326 = smul.addr %s325, 8
          %s327 = scalar_lea.vmem [#allocation7], %s326
          %329 = vsyncadd %s324, 0
          %s330 = smul.addr %s32, 2
          %s331 = smul.addr %s330, 4
          %s332 = scalar_lea.hbm %s2, %s331
          %s333 = sshll.u32 %s332, 4
          %s334 = int_to_ptr.hbm [resolvable:$true] %s333
          %s335 = sshll.u32 %s327, 4
          %s336 = int_to_ptr.vmem [resolvable:$true] %s335
          %341 = dma.hbm_to_vmem [thread:$0]  %s334, 128, %s336, %s324, 64, 64, 4
        $region40: #{tpu_custom_call.1} parent=27 // pred_fallthru
          _
        // Predicated region
        $region41: #{tpu_custom_call.1} parent=27 // pred_check
          %p342 = pneg %p139
        $region42: #{tpu_custom_call.1} parent=27 // pred_check_branch
          %344 = sbr.rel (%p342) target = $region44
        $region43: #{tpu_custom_call.1} parent=27 // pred_region
          %s345 = sand.u32 %s25, 1
          %s346 = scalar_lea.sflag [#allocation9], %s345
          %s347 = sand.u32 %s129, 1
          %s348 = smul.addr %s347, 128
          %s349 = scalar_lea.vmem [#allocation8], %s348
          %s350 = smul.u32 16, %s33
          %352 = vsyncadd %s346, 0
          %s353 = smul.addr %s32, 32
          %s354 = sadd.s32 %s350, %s353
          %s355 = smul.addr %s354, 8
          %s356 = scalar_lea.hbm %s3, %s355
          %s357 = sshll.u32 %s356, 4
          %s358 = int_to_ptr.hbm [resolvable:$true] %s357
          %s359 = sshll.u32 %s349, 4
          %s360 = int_to_ptr.vmem [resolvable:$true] %s359
          %365 = dma.hbm_to_vmem [thread:$0]  %s358, 2048, %s360, %s346, 128, 128, 8
        $region44: #{tpu_custom_call.1} parent=27 // pred_fallthru
          _
      $region28: #{tpu_custom_call.1} parent=5 // pred_fallthru
        _
      %p366 = scmp.le.s32.totalorder 1, %s25
      %p367 = scmp.lt.s32.totalorder %s25, 5
      %p368 = pnand %p366, %p367
      %p369 = pneg %p368
      // Predicated region
      $region45: #{tpu_custom_call.1} parent=5 // pred_check
        _
      $region46: #{tpu_custom_call.1} parent=5 // pred_check_branch
        %371 = sbr.rel (%p368) target = $region48
      $region47: #{tpu_custom_call.1} parent=5 // pred_region
        %s372 = ssub.s32 %s25, 1
        %s373 = sand.u32 %s52, 1
        %s374 = scalar_lea.sflag [#allocation3], %s373
        %s375 = sand.u32 %s52, 1
        %s376 = smul.addr %s375, 8
        %s377 = scalar_lea.vmem [#allocation2], %s376
        // Predicated region
        $region49: #{tpu_custom_call.1} parent=47 // pred_check
          %p378 = pneg %p65
        $region50: #{tpu_custom_call.1} parent=47 // pred_check_branch
          %380 = sbr.rel (%p378) target = $region52
        $region51: #{tpu_custom_call.1} parent=47 // pred_region
          %382 = dma.done %s374, 128
        $region52: #{tpu_custom_call.1} parent=47 // pred_fallthru
          _
        %s383 = sand.u32 %s30, 1
        %s384 = scalar_lea.sflag [#allocation6], %s383
        %s385 = sand.u32 %s78, 1
        %s386 = smul.addr %s385, 8
        %s387 = scalar_lea.vmem [#allocation5], %s386
        // Predicated region
        $region53: #{tpu_custom_call.1} parent=47 // pred_check
          %p388 = pneg %p91
        $region54: #{tpu_custom_call.1} parent=47 // pred_check_branch
          %390 = sbr.rel (%p388) target = $region56
        $region55: #{tpu_custom_call.1} parent=47 // pred_region
          %392 = dma.done %s384, 128
        $region56: #{tpu_custom_call.1} parent=47 // pred_fallthru
          _
        %s393 = sand.u32 %s30, 1
        %s394 = scalar_lea.sflag [#allocation6], %s393
        %s395 = sand.u32 %s104, 1
        %s396 = smul.addr %s395, 8
        %s397 = scalar_lea.vmem [#allocation7], %s396
        // Predicated region
        $region57: #{tpu_custom_call.1} parent=47 // pred_check
          %p398 = pneg %p117
        $region58: #{tpu_custom_call.1} parent=47 // pred_check_branch
          %400 = sbr.rel (%p398) target = $region60
        $region59: #{tpu_custom_call.1} parent=47 // pred_region
          %402 = dma.done %s394, 128
        $region60: #{tpu_custom_call.1} parent=47 // pred_fallthru
          _
        %s403 = sand.u32 %s30, 1
        %s404 = scalar_lea.sflag [#allocation9], %s403
        %s405 = sand.u32 %s132, 1
        %s406 = smul.addr %s405, 128
        %s407 = scalar_lea.vmem [#allocation8], %s406
        // Predicated region
        $region61: #{tpu_custom_call.1} parent=47 // pred_check
          %p408 = pneg %p145
        $region62: #{tpu_custom_call.1} parent=47 // pred_check_branch
          %410 = sbr.rel (%p408) target = $region64
        $region63: #{tpu_custom_call.1} parent=47 // pred_region
          %412 = dma.done %s404, 2048
        $region64: #{tpu_custom_call.1} parent=47 // pred_fallthru
          _
        // Predicated region
        $region65: #{tpu_custom_call.1} parent=47 // pred_check
          %p413 = pneg %p166
        $region66: #{tpu_custom_call.1} parent=47 // pred_check_branch
          %415 = sbr.rel (%p413) target = $region68
        $region67: #{tpu_custom_call.1} parent=47 // pred_region
          %417 = dma.done [#allocation9], 128
        $region68: #{tpu_custom_call.1} parent=47 // pred_fallthru
          _
        %s418 = sand.u32 %s52, 1
        %s419 = scalar_lea.sflag [#allocation3], %s418
        %s420 = sand.u32 %s52, 1
        %s421 = smul.addr %s420, 8
        %s422 = scalar_lea.vmem [#allocation2], %s421
        %p423 = pneg %p65
        %p424 = pneg %p62
        %s425 = sand.u32 %s30, 1
        %s426 = scalar_lea.sflag [#allocation6], %s425
        %s427 = sand.u32 %s78, 1
        %s428 = smul.addr %s427, 8
        %s429 = scalar_lea.vmem [#allocation5], %s428
        %p430 = pneg %p91
        %p431 = pneg %p88
        %s432 = sand.u32 %s30, 1
        %s433 = scalar_lea.sflag [#allocation6], %s432
        %s434 = sand.u32 %s104, 1
        %s435 = smul.addr %s434, 8
        %s436 = scalar_lea.vmem [#allocation7], %s435
        %p437 = pneg %p117
        %p438 = pneg %p114
        %s439 = sand.u32 %s30, 1
        %s440 = scalar_lea.sflag [#allocation9], %s439
        %s441 = sand.u32 %s132, 1
        %s442 = smul.addr %s441, 128
        %s443 = scalar_lea.vmem [#allocation8], %s442
        %p444 = pneg %p145
        %p445 = pneg %p142
        %p446 = pneg %p166
        %p447 = pneg %p163
        %p448 = pneg %p187
        %p449 = pneg %p184
        %p450 = pneg %p208
        %p451 = pneg %p205
        %p452 = pneg %p236
        %p453 = pneg %p233
        %s454 = sand.u32 %s223, 1
        %s455 = scalar_lea.sflag [#allocation4], %s454
        %s456 = sand.u32 %s223, 1
        %s457 = smul.addr %s456, 128
        %s458 = scalar_lea.vmem [#allocation11], %s457
        %s459 = smul.u32 16, %s35
        %s460 = smul.u32 16, %s35
        %v462 = vld [vmem:[%s377] sm:$0xf]
        %v463 = vld [vmem:[%s377 + $0x4] sm:$0xf]
        %v464 = vld [vmem:[%s387] sm:$0xf]
        %v465 = vld [vmem:[%s387 + $0x4] sm:$0xf]
        %v466 = vld [vmem:[%s397] sm:$0xf]
        %v467 = vld [vmem:[%s397 + $0x4] sm:$0xf]
        %v468 = vld [vmem:[%s6] sm:$0x1]
        %v470 = vperm.slane %v468, 0
        %v474 = vunpack.c.l.b16 %v462
        %v475 = vunpack.c.l.b16 %v463
        %v476 = vpack.c.b16 %v475, %v474
        %478 = vxpose.xlu0.c.b16.start [1/8] %v476, 128
        %479 = vxpose.xlu0.c.b16.cont [2/8] 0, 128
        %480 = vxpose.xlu0.c.b16.cont [3/8] 0, 128
        %481 = vxpose.xlu0.c.b16.cont [4/8] 0, 128
        %482 = vxpose.xlu0.c.b16.cont [5/8] 0, 128
        %483 = vxpose.xlu0.c.b16.cont [6/8] 0, 128
        %484 = vxpose.xlu0.c.b16.cont [7/8] 0, 128
        %485 = vxpose.xlu0.c.b16.end [8/8] 0, 128
        %v486 = vpop.trf.xlu0
        %v487 = vpop.trf.xlu0
        %v488 = vpop.trf.xlu0
        %v489 = vpop.trf.xlu0
        %v490 = vpop.trf.xlu0
        %v491 = vpop.trf.xlu0
        %v492 = vpop.trf.xlu0
        %v493 = vpop.trf.xlu0
        %v496 = vunpack.c.l.b16 %v464
        %v497 = vunpack.c.l.b16 %v465
        %v498 = vpack.c.b16 %v497, %v496
        %vm500 = vcmask 130048
        %v502 = vsel %vm500, %v486, 0
        %v505 = vsel %vm500, %v487, 0
        %v508 = vsel %vm500, %v488, 0
        %v511 = vsel %vm500, %v489, 0
        %v514 = vsel %vm500, %v490, 0
        %v517 = vsel %vm500, %v491, 0
        %v520 = vsel %vm500, %v492, 0
        %v523 = vsel %vm500, %v493, 0
        %525 = vmatpush.bf16.msra.mxu0 0
        %526 = vmatpush.bf16.msra.mxu0 0
        %527 = vmatpush.bf16.msra.mxu0 0
        %528 = vmatpush.bf16.msra.mxu0 0
        %529 = vmatpush.bf16.msra.mxu0 0
        %530 = vmatpush.bf16.msra.mxu0 0
        %531 = vmatpush.bf16.msra.mxu0 0
        %532 = vmatpush.bf16.msra.mxu0 %v498
        %533 = vmatmul.bf16.gmra.mxu0 %v502
        %v534 = vpop.f32.mrf.mxu0
        %v535 = vadd.f32 %v470, %v534
        %v536 = vpop.f32.mrf.mxu0
        %v537 = vadd.f32 %v470, %v536
        %538 = vmatmul.bf16.gmra.mxu0 %v505
        %v539 = vpop.f32.mrf.mxu0
        %v540 = vadd.f32 %v470, %v539
        %v541 = vpop.f32.mrf.mxu0
        %v542 = vadd.f32 %v470, %v541
        %543 = vmatmul.bf16.gmra.mxu0 %v508
        %v544 = vpop.f32.mrf.mxu0
        %v545 = vadd.f32 %v470, %v544
        %v546 = vpop.f32.mrf.mxu0
        %v547 = vadd.f32 %v470, %v546
        %548 = vmatmul.bf16.gmra.mxu0 %v511
        %v549 = vpop.f32.mrf.mxu0
        %v550 = vadd.f32 %v470, %v549
        %v551 = vpop.f32.mrf.mxu0
        %v552 = vadd.f32 %v470, %v551
        %553 = vmatmul.bf16.gmra.mxu0 %v514
        %v554 = vpop.f32.mrf.mxu0
        %v555 = vadd.f32 %v470, %v554
        %v556 = vpop.f32.mrf.mxu0
        %v557 = vadd.f32 %v470, %v556
        %558 = vmatmul.bf16.gmra.mxu0 %v517
        %v559 = vpop.f32.mrf.mxu0
        %v560 = vadd.f32 %v470, %v559
        %v561 = vpop.f32.mrf.mxu0
        %v562 = vadd.f32 %v470, %v561
        %563 = vmatmul.bf16.gmra.mxu0 %v520
        %v564 = vpop.f32.mrf.mxu0
        %v565 = vadd.f32 %v470, %v564
        %v566 = vpop.f32.mrf.mxu0
        %v567 = vadd.f32 %v470, %v566
        %568 = vmatmul.bf16.gmra.mxu0 %v523
        %v569 = vpop.f32.mrf.mxu0
        %v570 = vadd.f32 %v470, %v569
        %v571 = vpop.f32.mrf.mxu0
        %v572 = vadd.f32 %v470, %v571
        %573 = vdwg.mxu0
        %574 = vmax.xlane.f32.xlu0 %v535
        %v575 = vpop.xlane.xlu0 %574
        %576 = vmax.xlane.f32.xlu0 %v537
        %v577 = vpop.xlane.xlu0 %576
        %578 = vmax.xlane.f32.xlu0 %v540
        %v579 = vpop.xlane.xlu0 %578
        %580 = vmax.xlane.f32.xlu0 %v542
        %v581 = vpop.xlane.xlu0 %580
        %582 = vmax.xlane.f32.xlu0 %v545
        %v583 = vpop.xlane.xlu0 %582
        %584 = vmax.xlane.f32.xlu0 %v547
        %v585 = vpop.xlane.xlu0 %584
        %586 = vmax.xlane.f32.xlu0 %v550
        %v587 = vpop.xlane.xlu0 %586
        %588 = vmax.xlane.f32.xlu0 %v552
        %v589 = vpop.xlane.xlu0 %588
        %590 = vmax.xlane.f32.xlu0 %v555
        %v591 = vpop.xlane.xlu0 %590
        %592 = vmax.xlane.f32.xlu0 %v557
        %v593 = vpop.xlane.xlu0 %592
        %594 = vmax.xlane.f32.xlu0 %v560
        %v595 = vpop.xlane.xlu0 %594
        %596 = vmax.xlane.f32.xlu0 %v562
        %v597 = vpop.xlane.xlu0 %596
        %598 = vmax.xlane.f32.xlu0 %v565
        %v599 = vpop.xlane.xlu0 %598
        %600 = vmax.xlane.f32.xlu0 %v567
        %v601 = vpop.xlane.xlu0 %600
        %602 = vmax.xlane.f32.xlu0 %v570
        %v603 = vpop.xlane.xlu0 %602
        %604 = vmax.xlane.f32.xlu0 %v572
        %v605 = vpop.xlane.xlu0 %604
        %v606 = vsub.f32 %v535, %v575
        %v607 = vsub.f32 %v537, %v577
        %v608 = vsub.f32 %v540, %v579
        %v609 = vsub.f32 %v542, %v581
        %v610 = vsub.f32 %v545, %v583
        %v611 = vsub.f32 %v547, %v585
        %v612 = vsub.f32 %v550, %v587
        %v613 = vsub.f32 %v552, %v589
        %v614 = vsub.f32 %v555, %v591
        %v615 = vsub.f32 %v557, %v593
        %v616 = vsub.f32 %v560, %v595
        %v617 = vsub.f32 %v562, %v597
        %v618 = vsub.f32 %v565, %v599
        %v619 = vsub.f32 %v567, %v601
        %v620 = vsub.f32 %v570, %v603
        %v621 = vsub.f32 %v572, %v605
        %v622 = vmul.f32 %v606, 1.442695
        %v623 = vpow.pop %v622
        %v624 = vmul.f32 %v607, 1.442695
        %v625 = vpow.pop %v624
        %v626 = vmul.f32 %v608, 1.442695
        %v627 = vpow.pop %v626
        %v628 = vmul.f32 %v609, 1.442695
        %v629 = vpow.pop %v628
        %v630 = vmul.f32 %v610, 1.442695
        %v631 = vpow.pop %v630
        %v632 = vmul.f32 %v611, 1.442695
        %v633 = vpow.pop %v632
        %v634 = vmul.f32 %v612, 1.442695
        %v635 = vpow.pop %v634
        %v636 = vmul.f32 %v613, 1.442695
        %v637 = vpow.pop %v636
        %v638 = vmul.f32 %v614, 1.442695
        %v639 = vpow.pop %v638
        %v640 = vmul.f32 %v615, 1.442695
        %v641 = vpow.pop %v640
        %v642 = vmul.f32 %v616, 1.442695
        %v643 = vpow.pop %v642
        %v644 = vmul.f32 %v617, 1.442695
        %v645 = vpow.pop %v644
        %v646 = vmul.f32 %v618, 1.442695
        %v647 = vpow.pop %v646
        %v648 = vmul.f32 %v619, 1.442695
        %v649 = vpow.pop %v648
        %v650 = vmul.f32 %v620, 1.442695
        %v651 = vpow.pop %v650
        %v652 = vmul.f32 %v621, 1.442695
        %v653 = vpow.pop %v652
        %654 = vadd.xlane.f32.xlu0 %v623
        %v655 = vpop.xlane.xlu0 %654
        %656 = vadd.xlane.f32.xlu0 %v625
        %v657 = vpop.xlane.xlu0 %656
        %658 = vadd.xlane.f32.xlu0 %v627
        %v659 = vpop.xlane.xlu0 %658
        %660 = vadd.xlane.f32.xlu0 %v629
        %v661 = vpop.xlane.xlu0 %660
        %662 = vadd.xlane.f32.xlu0 %v631
        %v663 = vpop.xlane.xlu0 %662
        %664 = vadd.xlane.f32.xlu0 %v633
        %v665 = vpop.xlane.xlu0 %664
        %666 = vadd.xlane.f32.xlu0 %v635
        %v667 = vpop.xlane.xlu0 %666
        %668 = vadd.xlane.f32.xlu0 %v637
        %v669 = vpop.xlane.xlu0 %668
        %670 = vadd.xlane.f32.xlu0 %v639
        %v671 = vpop.xlane.xlu0 %670
        %672 = vadd.xlane.f32.xlu0 %v641
        %v673 = vpop.xlane.xlu0 %672
        %674 = vadd.xlane.f32.xlu0 %v643
        %v675 = vpop.xlane.xlu0 %674
        %676 = vadd.xlane.f32.xlu0 %v645
        %v677 = vpop.xlane.xlu0 %676
        %678 = vadd.xlane.f32.xlu0 %v647
        %v679 = vpop.xlane.xlu0 %678
        %680 = vadd.xlane.f32.xlu0 %v649
        %v681 = vpop.xlane.xlu0 %680
        %682 = vadd.xlane.f32.xlu0 %v651
        %v683 = vpop.xlane.xlu0 %682
        %684 = vadd.xlane.f32.xlu0 %v653
        %v685 = vpop.xlane.xlu0 %684
        %v686 = vpack.c.bf16 %v625, %v623
        %v687 = vpack.c.bf16 %v629, %v627
        %v688 = vpack.c.bf16 %v633, %v631
        %v689 = vpack.c.bf16 %v637, %v635
        %v690 = vpack.c.bf16 %v641, %v639
        %v691 = vpack.c.bf16 %v645, %v643
        %v692 = vpack.c.bf16 %v649, %v647
        %v693 = vpack.c.bf16 %v653, %v651
        %v696 = vunpack.c.l.b16 %v466
        %v697 = vunpack.c.l.b16 %v467
        %v698 = vpack.c.b16 %v697, %v696
        %700 = vmatpush.bf16.xpose.msra.mxu0 %v693
        %701 = vmatpush.bf16.xpose.msra.mxu0 %v692
        %702 = vmatpush.bf16.xpose.msra.mxu0 %v691
        %703 = vmatpush.bf16.xpose.msra.mxu0 %v690
        %704 = vmatpush.bf16.xpose.msra.mxu0 %v689
        %705 = vmatpush.bf16.xpose.msra.mxu0 %v688
        %706 = vmatpush.bf16.xpose.msra.mxu0 %v687
        %707 = vmatpush.bf16.xpose.msra.mxu0 %v686
        %708 = vmatmul.bf16.gmra.mxu0 %v698
        %v709 = vpop.f32.mrf.mxu0
        %v710 = vadd.f32 0.0, %v709
        %v711 = vpop.f32.mrf.mxu0
        %v712 = vadd.f32 0.0, %v711
        %713 = vdwg.mxu0
        %v714 = vpack.c.bf16 %v712, %v710
        %v715 = vld [vmem:[#allocation10] sm:$0xf]
        %v716 = vld [vmem:[#allocation10 + $0x4] sm:$0xf]
        %717 = vxpose.xlu0.c.b16.start [1/8] %v714, 128
        %718 = vxpose.xlu0.c.b16.cont [2/8] 0, 128
        %719 = vxpose.xlu0.c.b16.cont [3/8] 0, 128
        %720 = vxpose.xlu0.c.b16.cont [4/8] 0, 128
        %721 = vxpose.xlu0.c.b16.cont [5/8] 0, 128
        %722 = vxpose.xlu0.c.b16.cont [6/8] 0, 128
        %723 = vxpose.xlu0.c.b16.cont [7/8] 0, 128
        %724 = vxpose.xlu0.c.b16.end [8/8] 0, 128
        %v725 = vpop.trf.xlu0
        %v726 = vpop.trf.xlu0
        %v727 = vpop.trf.xlu0
        %v728 = vpop.trf.xlu0
        %v729 = vpop.trf.xlu0
        %v730 = vpop.trf.xlu0
        %v731 = vpop.trf.xlu0
        %v732 = vpop.trf.xlu0
        %v735 = vunpack.c.l.b16 %v715
        %v736 = vunpack.c.l.b16 %v716
        %v737 = vpack.c.b16 %v736, %v735
        %v740 = vsel %vm500, %v725, 0
        %v743 = vsel %vm500, %v726, 0
        %v746 = vsel %vm500, %v727, 0
        %v749 = vsel %vm500, %v728, 0
        %v752 = vsel %vm500, %v729, 0
        %v755 = vsel %vm500, %v730, 0
        %v758 = vsel %vm500, %v731, 0
        %v761 = vsel %vm500, %v732, 0
        %763 = vmatpush.bf16.msra.mxu0 0
        %764 = vmatpush.bf16.msra.mxu0 0
        %765 = vmatpush.bf16.msra.mxu0 0
        %766 = vmatpush.bf16.msra.mxu0 0
        %767 = vmatpush.bf16.msra.mxu0 0
        %768 = vmatpush.bf16.msra.mxu0 0
        %769 = vmatpush.bf16.msra.mxu0 0
        %770 = vmatpush.bf16.msra.mxu0 %v737
        %771 = vmatmul.bf16.gmra.mxu0 %v740
        %v772 = vpop.f32.mrf.mxu0
        %v773 = vadd.f32 0.0, %v772
        %v774 = vpop.f32.mrf.mxu0
        %v775 = vadd.f32 0.0, %v774
        %776 = vmatmul.bf16.gmra.mxu0 %v743
        %v777 = vpop.f32.mrf.mxu0
        %v778 = vadd.f32 0.0, %v777
        %v779 = vpop.f32.mrf.mxu0
        %v780 = vadd.f32 0.0, %v779
        %781 = vmatmul.bf16.gmra.mxu0 %v746
        %v782 = vpop.f32.mrf.mxu0
        %v783 = vadd.f32 0.0, %v782
        %v784 = vpop.f32.mrf.mxu0
        %v785 = vadd.f32 0.0, %v784
        %786 = vmatmul.bf16.gmra.mxu0 %v749
        %v787 = vpop.f32.mrf.mxu0
        %v788 = vadd.f32 0.0, %v787
        %v789 = vpop.f32.mrf.mxu0
        %v790 = vadd.f32 0.0, %v789
        %791 = vmatmul.bf16.gmra.mxu0 %v752
        %v792 = vpop.f32.mrf.mxu0
        %v793 = vadd.f32 0.0, %v792
        %v794 = vpop.f32.mrf.mxu0
        %v795 = vadd.f32 0.0, %v794
        %796 = vmatmul.bf16.gmra.mxu0 %v755
        %v797 = vpop.f32.mrf.mxu0
        %v798 = vadd.f32 0.0, %v797
        %v799 = vpop.f32.mrf.mxu0
        %v800 = vadd.f32 0.0, %v799
        %801 = vmatmul.bf16.gmra.mxu0 %v758
        %v802 = vpop.f32.mrf.mxu0
        %v803 = vadd.f32 0.0, %v802
        %v804 = vpop.f32.mrf.mxu0
        %v805 = vadd.f32 0.0, %v804
        %806 = vmatmul.bf16.gmra.mxu0 %v761
        %v807 = vpop.f32.mrf.mxu0
        %v808 = vadd.f32 0.0, %v807
        %v809 = vpop.f32.mrf.mxu0
        %v810 = vadd.f32 0.0, %v809
        %811 = vdwg.mxu0
        %v812 = vrcp.pop %v655
        %v813 = vmul.f32 %v655, %v812
        %v814 = vsub.f32 1.0, %v813
        %v815 = vmul.f32 %v812, %v814
        %v816 = vadd.f32 %v812, %v815
        %vm817 = vweird.f32 %v655
        %vm818 = vweird.f32 %v812
        %vm819 = vmor %vm817, %vm818
        %v820 = vsel %vm819, %v812, %v816
        %v821 = vand.u32 2147483647, %v655
        %vm822 = vcmp.eq.f32.partialorder %v821, 8.507059e+37
        %v823 = vand.u32 %v655, 2147483648
        %v824 = vor.u32 1.1754944e-38, %v823
        %v825 = vsel %vm822, %v824, %v820
        %v826 = vrcp.pop %v657
        %v827 = vmul.f32 %v657, %v826
        %v828 = vsub.f32 1.0, %v827
        %v829 = vmul.f32 %v826, %v828
        %v830 = vadd.f32 %v826, %v829
        %vm831 = vweird.f32 %v657
        %vm832 = vweird.f32 %v826
        %vm833 = vmor %vm831, %vm832
        %v834 = vsel %vm833, %v826, %v830
        %v835 = vand.u32 2147483647, %v657
        %vm836 = vcmp.eq.f32.partialorder %v835, 8.507059e+37
        %v837 = vand.u32 %v657, 2147483648
        %v838 = vor.u32 1.1754944e-38, %v837
        %v839 = vsel %vm836, %v838, %v834
        %v840 = vrcp.pop %v659
        %v841 = vmul.f32 %v659, %v840
        %v842 = vsub.f32 1.0, %v841
        %v843 = vmul.f32 %v840, %v842
        %v844 = vadd.f32 %v840, %v843
        %vm845 = vweird.f32 %v659
        %vm846 = vweird.f32 %v840
        %vm847 = vmor %vm845, %vm846
        %v848 = vsel %vm847, %v840, %v844
        %v849 = vand.u32 2147483647, %v659
        %vm850 = vcmp.eq.f32.partialorder %v849, 8.507059e+37
        %v851 = vand.u32 %v659, 2147483648
        %v852 = vor.u32 1.1754944e-38, %v851
        %v853 = vsel %vm850, %v852, %v848
        %v854 = vrcp.pop %v661
        %v855 = vmul.f32 %v661, %v854
        %v856 = vsub.f32 1.0, %v855
        %v857 = vmul.f32 %v854, %v856
        %v858 = vadd.f32 %v854, %v857
        %vm859 = vweird.f32 %v661
        %vm860 = vweird.f32 %v854
        %vm861 = vmor %vm859, %vm860
        %v862 = vsel %vm861, %v854, %v858
        %v863 = vand.u32 2147483647, %v661
        %vm864 = vcmp.eq.f32.partialorder %v863, 8.507059e+37
        %v865 = vand.u32 %v661, 2147483648
        %v866 = vor.u32 1.1754944e-38, %v865
        %v867 = vsel %vm864, %v866, %v862
        %v868 = vrcp.pop %v663
        %v869 = vmul.f32 %v663, %v868
        %v870 = vsub.f32 1.0, %v869
        %v871 = vmul.f32 %v868, %v870
        %v872 = vadd.f32 %v868, %v871
        %vm873 = vweird.f32 %v663
        %vm874 = vweird.f32 %v868
        %vm875 = vmor %vm873, %vm874
        %v876 = vsel %vm875, %v868, %v872
        %v877 = vand.u32 2147483647, %v663
        %vm878 = vcmp.eq.f32.partialorder %v877, 8.507059e+37
        %v879 = vand.u32 %v663, 2147483648
        %v880 = vor.u32 1.1754944e-38, %v879
        %v881 = vsel %vm878, %v880, %v876
        %v882 = vrcp.pop %v665
        %v883 = vmul.f32 %v665, %v882
        %v884 = vsub.f32 1.0, %v883
        %v885 = vmul.f32 %v882, %v884
        %v886 = vadd.f32 %v882, %v885
        %vm887 = vweird.f32 %v665
        %vm888 = vweird.f32 %v882
        %vm889 = vmor %vm887, %vm888
        %v890 = vsel %vm889, %v882, %v886
        %v891 = vand.u32 2147483647, %v665
        %vm892 = vcmp.eq.f32.partialorder %v891, 8.507059e+37
        %v893 = vand.u32 %v665, 2147483648
        %v894 = vor.u32 1.1754944e-38, %v893
        %v895 = vsel %vm892, %v894, %v890
        %v896 = vrcp.pop %v667
        %v897 = vmul.f32 %v667, %v896
        %v898 = vsub.f32 1.0, %v897
        %v899 = vmul.f32 %v896, %v898
        %v900 = vadd.f32 %v896, %v899
        %vm901 = vweird.f32 %v667
        %vm902 = vweird.f32 %v896
        %vm903 = vmor %vm901, %vm902
        %v904 = vsel %vm903, %v896, %v900
        %v905 = vand.u32 2147483647, %v667
        %vm906 = vcmp.eq.f32.partialorder %v905, 8.507059e+37
        %v907 = vand.u32 %v667, 2147483648
        %v908 = vor.u32 1.1754944e-38, %v907
        %v909 = vsel %vm906, %v908, %v904
        %v910 = vrcp.pop %v669
        %v911 = vmul.f32 %v669, %v910
        %v912 = vsub.f32 1.0, %v911
        %v913 = vmul.f32 %v910, %v912
        %v914 = vadd.f32 %v910, %v913
        %vm915 = vweird.f32 %v669
        %vm916 = vweird.f32 %v910
        %vm917 = vmor %vm915, %vm916
        %v918 = vsel %vm917, %v910, %v914
        %v919 = vand.u32 2147483647, %v669
        %vm920 = vcmp.eq.f32.partialorder %v919, 8.507059e+37
        %v921 = vand.u32 %v669, 2147483648
        %v922 = vor.u32 1.1754944e-38, %v921
        %v923 = vsel %vm920, %v922, %v918
        %v924 = vrcp.pop %v671
        %v925 = vmul.f32 %v671, %v924
        %v926 = vsub.f32 1.0, %v925
        %v927 = vmul.f32 %v924, %v926
        %v928 = vadd.f32 %v924, %v927
        %vm929 = vweird.f32 %v671
        %vm930 = vweird.f32 %v924
        %vm931 = vmor %vm929, %vm930
        %v932 = vsel %vm931, %v924, %v928
        %v933 = vand.u32 2147483647, %v671
        %vm934 = vcmp.eq.f32.partialorder %v933, 8.507059e+37
        %v935 = vand.u32 %v671, 2147483648
        %v936 = vor.u32 1.1754944e-38, %v935
        %v937 = vsel %vm934, %v936, %v932
        %v938 = vrcp.pop %v673
        %v939 = vmul.f32 %v673, %v938
        %v940 = vsub.f32 1.0, %v939
        %v941 = vmul.f32 %v938, %v940
        %v942 = vadd.f32 %v938, %v941
        %vm943 = vweird.f32 %v673
        %vm944 = vweird.f32 %v938
        %vm945 = vmor %vm943, %vm944
        %v946 = vsel %vm945, %v938, %v942
        %v947 = vand.u32 2147483647, %v673
        %vm948 = vcmp.eq.f32.partialorder %v947, 8.507059e+37
        %v949 = vand.u32 %v673, 2147483648
        %v950 = vor.u32 1.1754944e-38, %v949
        %v951 = vsel %vm948, %v950, %v946
        %v952 = vrcp.pop %v675
        %v953 = vmul.f32 %v675, %v952
        %v954 = vsub.f32 1.0, %v953
        %v955 = vmul.f32 %v952, %v954
        %v956 = vadd.f32 %v952, %v955
        %vm957 = vweird.f32 %v675
        %vm958 = vweird.f32 %v952
        %vm959 = vmor %vm957, %vm958
        %v960 = vsel %vm959, %v952, %v956
        %v961 = vand.u32 2147483647, %v675
        %vm962 = vcmp.eq.f32.partialorder %v961, 8.507059e+37
        %v963 = vand.u32 %v675, 2147483648
        %v964 = vor.u32 1.1754944e-38, %v963
        %v965 = vsel %vm962, %v964, %v960
        %v966 = vrcp.pop %v677
        %v967 = vmul.f32 %v677, %v966
        %v968 = vsub.f32 1.0, %v967
        %v969 = vmul.f32 %v966, %v968
        %v970 = vadd.f32 %v966, %v969
        %vm971 = vweird.f32 %v677
        %vm972 = vweird.f32 %v966
        %vm973 = vmor %vm971, %vm972
        %v974 = vsel %vm973, %v966, %v970
        %v975 = vand.u32 2147483647, %v677
        %vm976 = vcmp.eq.f32.partialorder %v975, 8.507059e+37
        %v977 = vand.u32 %v677, 2147483648
        %v978 = vor.u32 1.1754944e-38, %v977
        %v979 = vsel %vm976, %v978, %v974
        %v980 = vrcp.pop %v679
        %v981 = vmul.f32 %v679, %v980
        %v982 = vsub.f32 1.0, %v981
        %v983 = vmul.f32 %v980, %v982
        %v984 = vadd.f32 %v980, %v983
        %vm985 = vweird.f32 %v679
        %vm986 = vweird.f32 %v980
        %vm987 = vmor %vm985, %vm986
        %v988 = vsel %vm987, %v980, %v984
        %v989 = vand.u32 2147483647, %v679
        %vm990 = vcmp.eq.f32.partialorder %v989, 8.507059e+37
        %v991 = vand.u32 %v679, 2147483648
        %v992 = vor.u32 1.1754944e-38, %v991
        %v993 = vsel %vm990, %v992, %v988
        %v994 = vrcp.pop %v681
        %v995 = vmul.f32 %v681, %v994
        %v996 = vsub.f32 1.0, %v995
        %v997 = vmul.f32 %v994, %v996
        %v998 = vadd.f32 %v994, %v997
        %vm999 = vweird.f32 %v681
        %vm1000 = vweird.f32 %v994
        %vm1001 = vmor %vm999, %vm1000
        %v1002 = vsel %vm1001, %v994, %v998
        %v1003 = vand.u32 2147483647, %v681
        %vm1004 = vcmp.eq.f32.partialorder %v1003, 8.507059e+37
        %v1005 = vand.u32 %v681, 2147483648
        %v1006 = vor.u32 1.1754944e-38, %v1005
        %v1007 = vsel %vm1004, %v1006, %v1002
        %v1008 = vrcp.pop %v683
        %v1009 = vmul.f32 %v683, %v1008
        %v1010 = vsub.f32 1.0, %v1009
        %v1011 = vmul.f32 %v1008, %v1010
        %v1012 = vadd.f32 %v1008, %v1011
        %vm1013 = vweird.f32 %v683
        %vm1014 = vweird.f32 %v1008
        %vm1015 = vmor %vm1013, %vm1014
        %v1016 = vsel %vm1015, %v1008, %v1012
        %v1017 = vand.u32 2147483647, %v683
        %vm1018 = vcmp.eq.f32.partialorder %v1017, 8.507059e+37
        %v1019 = vand.u32 %v683, 2147483648
        %v1020 = vor.u32 1.1754944e-38, %v1019
        %v1021 = vsel %vm1018, %v1020, %v1016
        %v1022 = vrcp.pop %v685
        %v1023 = vmul.f32 %v685, %v1022
        %v1024 = vsub.f32 1.0, %v1023
        %v1025 = vmul.f32 %v1022, %v1024
        %v1026 = vadd.f32 %v1022, %v1025
        %vm1027 = vweird.f32 %v685
        %vm1028 = vweird.f32 %v1022
        %vm1029 = vmor %vm1027, %vm1028
        %v1030 = vsel %vm1029, %v1022, %v1026
        %v1031 = vand.u32 2147483647, %v685
        %vm1032 = vcmp.eq.f32.partialorder %v1031, 8.507059e+37
        %v1033 = vand.u32 %v685, 2147483648
        %v1034 = vor.u32 1.1754944e-38, %v1033
        %v1035 = vsel %vm1032, %v1034, %v1030
        %v1036 = vmul.f32 %v773, %v825
        %v1037 = vmul.f32 %v775, %v839
        %v1038 = vmul.f32 %v778, %v853
        %v1039 = vmul.f32 %v780, %v867
        %v1040 = vmul.f32 %v783, %v881
        %v1041 = vmul.f32 %v785, %v895
        %v1042 = vmul.f32 %v788, %v909
        %v1043 = vmul.f32 %v790, %v923
        %v1044 = vmul.f32 %v793, %v937
        %v1045 = vmul.f32 %v795, %v951
        %v1046 = vmul.f32 %v798, %v965
        %v1047 = vmul.f32 %v800, %v979
        %v1048 = vmul.f32 %v803, %v993
        %v1049 = vmul.f32 %v805, %v1007
        %v1050 = vmul.f32 %v808, %v1021
        %v1051 = vmul.f32 %v810, %v1035
        %v1052 = vld [vmem:[%s5] sm:$0x1]
        %v1054 = vperm.slane %v1052, 0
        %v1056 = vadd.f32 %v1036, %v1054
        %v1057 = vadd.f32 %v1037, %v1054
        %v1058 = vadd.f32 %v1038, %v1054
        %v1059 = vadd.f32 %v1039, %v1054
        %v1060 = vadd.f32 %v1040, %v1054
        %v1061 = vadd.f32 %v1041, %v1054
        %v1062 = vadd.f32 %v1042, %v1054
        %v1063 = vadd.f32 %v1043, %v1054
        %v1064 = vadd.f32 %v1044, %v1054
        %v1065 = vadd.f32 %v1045, %v1054
        %v1066 = vadd.f32 %v1046, %v1054
        %v1067 = vadd.f32 %v1047, %v1054
        %v1068 = vadd.f32 %v1048, %v1054
        %v1069 = vadd.f32 %v1049, %v1054
        %v1070 = vadd.f32 %v1050, %v1054
        %v1071 = vadd.f32 %v1051, %v1054
        %v1072 = vld [vmem:[%s407] sm:$0xff]
        %v1073 = vld [vmem:[%s407 + $0x8] sm:$0xff]
        %v1074 = vld [vmem:[%s407 + $0x10] sm:$0xff]
        %v1075 = vld [vmem:[%s407 + $0x18] sm:$0xff]
        %v1076 = vld [vmem:[%s407 + $0x20] sm:$0xff]
        %v1077 = vld [vmem:[%s407 + $0x28] sm:$0xff]
        %v1078 = vld [vmem:[%s407 + $0x30] sm:$0xff]
        %v1079 = vld [vmem:[%s407 + $0x38] sm:$0xff]
        %v1080 = vld [vmem:[%s407 + $0x40] sm:$0xff]
        %v1081 = vld [vmem:[%s407 + $0x48] sm:$0xff]
        %v1082 = vld [vmem:[%s407 + $0x50] sm:$0xff]
        %v1083 = vld [vmem:[%s407 + $0x58] sm:$0xff]
        %v1084 = vld [vmem:[%s407 + $0x60] sm:$0xff]
        %v1085 = vld [vmem:[%s407 + $0x68] sm:$0xff]
        %v1086 = vld [vmem:[%s407 + $0x70] sm:$0xff]
        %v1087 = vld [vmem:[%s407 + $0x78] sm:$0xff]
        %v1088 = vadd.f32 %v1056, %v1072
        %v1089 = vadd.f32 %v1057, %v1073
        %v1090 = vadd.f32 %v1058, %v1074
        %v1091 = vadd.f32 %v1059, %v1075
        %v1092 = vadd.f32 %v1060, %v1076
        %v1093 = vadd.f32 %v1061, %v1077
        %v1094 = vadd.f32 %v1062, %v1078
        %v1095 = vadd.f32 %v1063, %v1079
        %v1096 = vadd.f32 %v1064, %v1080
        %v1097 = vadd.f32 %v1065, %v1081
        %v1098 = vadd.f32 %v1066, %v1082
        %v1099 = vadd.f32 %v1067, %v1083
        %v1100 = vadd.f32 %v1068, %v1084
        %v1101 = vadd.f32 %v1069, %v1085
        %v1102 = vadd.f32 %v1070, %v1086
        %v1103 = vadd.f32 %v1071, %v1087
        %1104 = vst [vmem:[%s458] sm:$0xff] %v1088
        %1105 = vst [vmem:[%s458 + $0x8] sm:$0xff] %v1089
        %1106 = vst [vmem:[%s458 + $0x10] sm:$0xff] %v1090
        %1107 = vst [vmem:[%s458 + $0x18] sm:$0xff] %v1091
        %1108 = vst [vmem:[%s458 + $0x20] sm:$0xff] %v1092
        %1109 = vst [vmem:[%s458 + $0x28] sm:$0xff] %v1093
        %1110 = vst [vmem:[%s458 + $0x30] sm:$0xff] %v1094
        %1111 = vst [vmem:[%s458 + $0x38] sm:$0xff] %v1095
        %1112 = vst [vmem:[%s458 + $0x40] sm:$0xff] %v1096
        %1113 = vst [vmem:[%s458 + $0x48] sm:$0xff] %v1097
        %1114 = vst [vmem:[%s458 + $0x50] sm:$0xff] %v1098
        %1115 = vst [vmem:[%s458 + $0x58] sm:$0xff] %v1099
        %1116 = vst [vmem:[%s458 + $0x60] sm:$0xff] %v1100
        %1117 = vst [vmem:[%s458 + $0x68] sm:$0xff] %v1101
        %1118 = vst [vmem:[%s458 + $0x70] sm:$0xff] %v1102
        %1119 = vst [vmem:[%s458 + $0x78] sm:$0xff] %v1103
        %s1120 = sand.u32 %s223, 1
        %s1121 = scalar_lea.sflag [#allocation4], %s1120
        %s1122 = sand.u32 %s223, 1
        %s1123 = smul.addr %s1122, 128
        %s1124 = scalar_lea.vmem [#allocation11], %s1123
        // Predicated region
        $region69: #{tpu_custom_call.1} parent=47 // pred_check
          %p1125 = pneg %p233
        $region70: #{tpu_custom_call.1} parent=47 // pred_check_branch
          %1127 = sbr.rel (%p1125) target = $region72
        $region71: #{tpu_custom_call.1} parent=47 // pred_region
          %s1128 = smul.u32 16, %s35
          %1130 = vsyncadd %s1121, 0
          %s1131 = smul.addr %s34, 32
          %s1132 = sadd.s32 %s1128, %s1131
          %s1133 = smul.addr %s1132, 8
          %s1134 = scalar_lea.hbm %s7, %s1133
          %s1135 = sshll.u32 %s1124, 4
          %s1136 = int_to_ptr.vmem [resolvable:$true] %s1135
          %s1137 = sshll.u32 %s1134, 4
          %s1138 = int_to_ptr.hbm [resolvable:$true] %s1137
          %1143 = dma.vmem_to_hbm [thread:$0]  %s1136, 2048, %s1138, %s1121, 128, 128, 8
        $region72: #{tpu_custom_call.1} parent=47 // pred_fallthru
          _
      $region48: #{tpu_custom_call.1} parent=5 // pred_fallthru
        _
      %p1144 = scmp.le.s32.totalorder 2, %s25
      // Predicated region
      $region73: #{tpu_custom_call.1} parent=5 // pred_check
        %p1145 = pneg %p1144
      $region74: #{tpu_custom_call.1} parent=5 // pred_check_branch
        %1147 = sbr.rel (%p1145) target = $region76
      $region75: #{tpu_custom_call.1} parent=5 // pred_region
        %s1148 = ssub.s32 %s25, 2
        // Predicated region
        $region77: #{tpu_custom_call.1} parent=75 // pred_check
          %p1149 = pneg %p239
        $region78: #{tpu_custom_call.1} parent=75 // pred_check_branch
          %1151 = sbr.rel (%p1149) target = $region80
        $region79: #{tpu_custom_call.1} parent=75 // pred_region
          %s1152 = sand.u32 %s224, 1
          %s1153 = scalar_lea.sflag [#allocation4], %s1152
          %s1154 = sand.u32 %s224, 1
          %s1155 = smul.addr %s1154, 128
          %s1156 = scalar_lea.vmem [#allocation11], %s1155
          %1158 = dma.done %s1153, 2048
        $region80: #{tpu_custom_call.1} parent=75 // pred_fallthru
          _
      $region76: #{tpu_custom_call.1} parent=5 // pred_fallthru
        _
    $region6: #{tpu_custom_call.1} parent=1 // loop_footer
      %s29 = sadd.s32 1, %s25
    $region7: #{tpu_custom_call.1} parent=1 // loop_footer_branch
      %24 = sbr.rel target = $region3
    $region8: #{tpu_custom_call.1} parent=1 // loop_exit
      _
    %1159 = vsyncpa [#allocation3], 1
    %s1160 = scalar_lea.sflag [#allocation3], 1
    %1161 = vsyncpa %s1160, 1
    %1162 = vsyncpa [#allocation6], 1
    %s1163 = scalar_lea.sflag [#allocation6], 1
    %1164 = vsyncpa %s1163, 1
    %1165 = vsyncpa [#allocation9], 1
    %s1166 = scalar_lea.sflag [#allocation9], 1
    %1167 = vsyncpa %s1166, 1
    %1168 = vsyncpa [#allocation4], 1
    %s1169 = scalar_lea.sflag [#allocation4], 1
    %1170 = vsyncpa %s1169, 1

</llo_original>
